<compile_context>
chip_gen: v7x
topology: tpu7x:2x2x1
jax: 0.10.0
libtpu: 0.0.40
codegen_flags: <defaults>
</compile_context>

<pallas_src>
import functools
import inspect

import jax
import jax.numpy as jnp
from jax.experimental import pallas as pl
from jax.experimental.pallas import tpu as pltpu


def _round_up(x, m):
    return pl.cdiv(x, m) * m


def _supports_pipeline_mode():
    """Explicit feature probe for BlockSpec(pipeline_mode=pl.Buffered(n))."""
    if not hasattr(pl, "Buffered"):
        return False
    try:
        return "pipeline_mode" in inspect.signature(pl.BlockSpec).parameters
    except (TypeError, ValueError):
        return False


_HAS_BUFFERED = _supports_pipeline_mode()
_MIB = 1024 * 1024


def _vmem_budget_bytes():
    """~48 MiB on 64-MiB parts (v7x), ~96 MiB on 128-MiB parts (v5e/v6e)."""
    cap = 64 * _MIB
    try:  # narrow capability probe only; conservative fallback if unavailable
        info = pltpu.get_tpu_info()
        cap = int(getattr(info, "vmem_capacity_bytes", cap)) or cap
    except Exception:
        pass
    return max(min((3 * cap) // 4, cap - 16 * _MIB), 32 * _MIB)


def _vmem_need_bytes(tm, d_in, hidden, vocab, out_bytes, weight_copies):
    # bf16 weights + f32 biases (resident), double-buffered activation/output
    # tiles, and the f32 intermediates the kernel holds (logits/z/exp + h).
    weight_bytes = (d_in * hidden + hidden * vocab) * 2 + (hidden + vocab) * 4
    io_bytes = 2 * tm * d_in * 4 + 2 * tm * vocab * out_bytes
    interm_bytes = 3 * tm * vocab * 4 + 2 * tm * hidden * 4
    return weight_copies * weight_bytes + io_bytes + interm_bytes


def _choose_row_tile(m_rows, tm_req):
    """Pick a row tile (multiple of 8). Prefer a divisor of m_rows so the
    activations / outputs never need a pad or post-kernel slice copy."""
    tm_req = max(8, (tm_req // 8) * 8)
    if m_rows % 8 == 0:
        cap = min(tm_req, m_rows)
        cap -= cap % 8
        for cand in range(cap, max(8, cap // 4) - 1, -8):
            if m_rows % cand == 0:
                return cand, m_rows
    # Awkward B*T: accept a small amount of row padding (sliced off afterwards).
    tm_eff = min(tm_req, _round_up(m_rows, 8))
    return tm_eff, _round_up(m_rows, tm_eff)


def _ctc_decoder_kernel(x_ref, w1_ref, b1_ref, w2_ref, b2_ref, o_ref):
    # x_ref: (tm, D_in) f32, w1_ref: (D_in, H) bf16, b1_ref: (1, H) f32
    # w2_ref: (H, V) bf16,   b2_ref: (1, V)  f32,    o_ref: (tm, V)
    x = x_ref[...].astype(jnp.bfloat16)

    # Linear 1 (MXU, bf16 operands / f32 accumulate) + SiLU in f32.
    h = jnp.dot(x, w1_ref[...], preferred_element_type=jnp.float32) + b1_ref[...]
    h = h * jax.nn.sigmoid(h)  # silu(x) = x * sigmoid(x)

    # Linear 2 (MXU, bf16 operands / f32 accumulate).
    logits = (
        jnp.dot(h.astype(jnp.bfloat16), w2_ref[...],
                preferred_element_type=jnp.float32)
        + b2_ref[...]
    )

    # Numerically stable log_softmax over the full (unpadded) vocab axis.
    m = jnp.max(logits, axis=-1, keepdims=True)
    z = logits - m
    lse = jnp.log(jnp.sum(jnp.exp(z), axis=-1, keepdims=True))
    o_ref[...] = (z - lse).astype(o_ref.dtype)


@functools.partial(jax.jit, static_argnames=("tm", "out_dtype"))
def _ctc_decoder_impl(enc_outs, w1, b1, w2, b2, *, tm, out_dtype):
    B, T, d_in = enc_outs.shape
    hidden = w1.shape[1]
    vocab = w2.shape[1]
    out_dtype = jnp.float32 if out_dtype is None else jnp.dtype(out_dtype)
    out_bytes = jnp.dtype(out_dtype).itemsize

    # bf16 weights for the MXU; biases stay f32 (added to f32 accumulators).
    w1 = w1.astype(jnp.bfloat16)
    w2 = w2.astype(jnp.bfloat16)
    b1 = b1.reshape(1, hidden).astype(jnp.float32)
    b2 = b2.reshape(1, vocab).astype(jnp.float32)

    # --- VMEM-aware row tiling (flatten B,T into rows) -----------------------
    M = B * T
    budget = _vmem_budget_bytes()
    weight_copies = 1 if _HAS_BUFFERED else 2
    tm_eff = tm
    while (tm_eff > 8 and
           _vmem_need_bytes(tm_eff, d_in, hidden, vocab, out_bytes,
                            weight_copies) > budget):
        tm_eff = max(8, ((tm_eff // 2) // 8) * 8)
    # TODO(synk): when resident bf16 W2 alone exceeds the VMEM budget (very
    # large vocab on v7x's 64 MiB), switch to a vocab-tiled two-pass /
    # online-logsumexp path instead of shrinking tm.
    tm_eff, M_pad = _choose_row_tile(M, tm_eff)

    x2d = enc_outs.reshape(M, d_in)
    if M_pad != M:
        x2d = jnp.pad(x2d, ((0, M_pad - M), (0, 0)))
    grid = (M_pad // tm_eff,)

    need = _vmem_need_bytes(tm_eff, d_in, hidden, vocab, out_bytes, weight_copies)
    vmem_limit = int(min(budget, max(need + 4 * _MIB, 16 * _MIB)))

    def _resident(shape):
        # Constant index_map -> stays resident across the grid; single-buffer
        # it when supported so large weights don't steal VMEM from the row tile.
        if _HAS_BUFFERED:
            return pl.BlockSpec(shape, lambda i: (0, 0),
                                pipeline_mode=pl.Buffered(1))
        return pl.BlockSpec(shape, lambda i: (0, 0))

    out2d = pl.pallas_call(
        _ctc_decoder_kernel,
        out_shape=jax.ShapeDtypeStruct((M_pad, vocab), out_dtype),
        grid_spec=pltpu.PrefetchScalarGridSpec(
            num_scalar_prefetch=0,
            grid=grid,
            in_specs=[
                pl.BlockSpec((tm_eff, d_in), lambda i: (i, 0)),   # activations
                _resident((d_in, hidden)),                        # W1
                _resident((1, hidden)),                           # b1
                _resident((hidden, vocab)),                       # W2
                _resident((1, vocab)),                            # b2
            ],
            out_specs=pl.BlockSpec((tm_eff, vocab), lambda i: (i, 0)),
        ),
        compiler_params=pltpu.CompilerParams(
            dimension_semantics=("parallel",),   # row axis shards across TCs
            vmem_limit_bytes=vmem_limit,
        ),
    )(x2d, w1, b1, w2, b2)

    if M_pad != M:  # awkward B*T only; common shapes take the copy-free path
        out2d = out2d[:M]
    return out2d.reshape(B, T, vocab)


def ctc_decoder_forward(enc_outs, w1, b1, w2, b2, *, tm=512, out_dtype=None):
    """enc_outs: (B, T, D_in).  w1: (D_in, H), b1: (H,) or (1, H),
    w2: (H, V), b2: (V,) or (1, V).  Returns (B, T, V) log-probs, float32 by
    default.  Pass out_dtype=jnp.bfloat16 to halve the output HBM stream if the
    downstream CTC decode tolerates bf16 log-probs.
    Note: matmuls use bf16 operands on the MXU with f32 accumulation (small
    deviation from PyTorch's pure-f32 Linear)."""
    return _ctc_decoder_impl(enc_outs, w1, b1, w2, b2, tm=tm, out_dtype=out_dtype)


def init_params(key, input_dim, hidden_dim, output_dim):
    """Deterministic synthetic parameters (stored transposed: (in, out))."""
    k1, k2, k3, k4 = jax.random.split(key, 4)
    w1 = jax.random.normal(k1, (input_dim, hidden_dim), jnp.float32) * 0.1
    b1 = jax.random.normal(k2, (1, hidden_dim), jnp.float32) * 0.1
    w2 = jax.random.normal(k3, (hidden_dim, output_dim), jnp.float32) * 0.1
    b2 = jax.random.normal(k4, (1, output_dim), jnp.float32) * 0.1
    return w1, b1, w2, b2


if __name__ == "__main__":
    B, T = 2, 8
    input_dim, hidden_dim, output_dim = 32, 32, 40

    key = jax.random.PRNGKey(0)
    k_x, k_p = jax.random.split(key)
    enc_outs = jax.random.normal(k_x, (B, T, input_dim), jnp.float32)
    w1, b1, w2, b2 = init_params(k_p, input_dim, hidden_dim, output_dim)

    out = ctc_decoder_forward(enc_outs, w1, b1, w2, b2)
    out = jax.block_until_ready(out)

    # sanity: log_softmax rows should sum (in prob space) to ~1
    assert out.shape == (B, T, output_dim)
    row_sums = jnp.sum(jnp.exp(out), axis=-1)
    assert jnp.allclose(row_sums, 1.0, atol=1e-3), row_sums

    # reference check in plain f32 JAX (kernel matmuls use bf16 operands,
    # so allow a slightly looser tolerance)
    h_ref = enc_outs @ w1 + b1[0]
    h_ref = h_ref * jax.nn.sigmoid(h_ref)
    logits_ref = h_ref @ w2 + b2[0]
    ref = jax.nn.log_softmax(logits_ref, axis=2)
    assert jnp.allclose(out, ref, atol=2e-2, rtol=2e-2), float(
        jnp.max(jnp.abs(out - ref)))

    print("KERNEL_OK")
</pallas_src>

<mosaic_0001>
module attributes {stable_mosaic.version = 11 : i64} {
  func.func @_ctc_decoder_kernel(%arg0: i32, %arg1: memref<16x32xf32, #tpu.memory_space<vmem>>, %arg2: memref<32x32xbf16, #tpu.memory_space<vmem>>, %arg3: memref<1x32xf32, #tpu.memory_space<vmem>>, %arg4: memref<32x40xbf16, #tpu.memory_space<vmem>>, %arg5: memref<1x40xf32, #tpu.memory_space<vmem>>, %arg6: memref<16x40xf32, #tpu.memory_space<vmem>>) attributes {dimension_semantics = [#tpu.dimension_semantics<parallel>], iteration_bounds = array<i64: 1>, scalar_prefetch = 0 : i64, scratch_operands = 0 : i64, tpu.core_type = #tpu.core_type<tc>, window_params = [{transform_indices = @transform_0, window_bounds = array<i64: 16, 32>}, {pipeline_mode = #tpu.pipeline_mode<synchronous>, transform_indices = @transform_1, window_bounds = array<i64: 32, 32>}, {pipeline_mode = #tpu.pipeline_mode<synchronous>, transform_indices = @transform_2, window_bounds = array<i64: 1, 32>}, {pipeline_mode = #tpu.pipeline_mode<synchronous>, transform_indices = @transform_3, window_bounds = array<i64: 32, 40>}, {pipeline_mode = #tpu.pipeline_mode<synchronous>, transform_indices = @transform_4, window_bounds = array<i64: 1, 40>}, {transform_indices = @transform_5, window_bounds = array<i64: 16, 40>}]} {
    %c0 = arith.constant 0 : index
    %c0_0 = arith.constant 0 : index
    %0 = vector.load %arg1[%c0, %c0_0] : memref<16x32xf32, #tpu.memory_space<vmem>>, vector<16x32xf32>
    %1 = arith.truncf %0 : vector<16x32xf32> to vector<16x32xbf16>
    %c0_1 = arith.constant 0 : index
    %c0_2 = arith.constant 0 : index
    %2 = vector.load %arg2[%c0_1, %c0_2] : memref<32x32xbf16, #tpu.memory_space<vmem>>, vector<32x32xbf16>
    %cst = arith.constant dense<0.000000e+00> : vector<16x32xf32>
    %3 = tpu.matmul %1, %2, %cst {dimension_numbers = #tpu.dot_dimension_numbers<[1], [0], [0], [1], [0, 0, 1, 1], [], []>} : vector<16x32xbf16>, vector<32x32xbf16>, vector<16x32xf32> -> vector<16x32xf32>
    %c0_3 = arith.constant 0 : index
    %c0_4 = arith.constant 0 : index
    %4 = vector.load %arg3[%c0_3, %c0_4] : memref<1x32xf32, #tpu.memory_space<vmem>>, vector<1x32xf32>
    %5 = vector.broadcast %4 : vector<1x32xf32> to vector<16x32xf32>
    %6 = arith.addf %3, %5 : vector<16x32xf32>
    %7 = arith.negf %6 : vector<16x32xf32>
    %8 = math.exp %7 : vector<16x32xf32>
    %cst_5 = arith.constant 1.000000e+00 : f32
    %9 = vector.broadcast %cst_5 : f32 to vector<16x32xf32>
    %10 = arith.addf %9, %8 : vector<16x32xf32>
    %11 = arith.divf %9, %10 : vector<16x32xf32>
    %12 = arith.mulf %6, %11 : vector<16x32xf32>
    %13 = arith.truncf %12 : vector<16x32xf32> to vector<16x32xbf16>
    %c0_6 = arith.constant 0 : index
    %c0_7 = arith.constant 0 : index
    %14 = vector.load %arg4[%c0_6, %c0_7] : memref<32x40xbf16, #tpu.memory_space<vmem>>, vector<32x40xbf16>
    %cst_8 = arith.constant dense<0.000000e+00> : vector<16x40xf32>
    %15 = tpu.matmul %13, %14, %cst_8 {dimension_numbers = #tpu.dot_dimension_numbers<[1], [0], [0], [1], [0, 0, 1, 1], [], []>} : vector<16x32xbf16>, vector<32x40xbf16>, vector<16x40xf32> -> vector<16x40xf32>
    %c0_9 = arith.constant 0 : index
    %c0_10 = arith.constant 0 : index
    %16 = vector.load %arg5[%c0_9, %c0_10] : memref<1x40xf32, #tpu.memory_space<vmem>>, vector<1x40xf32>
    %17 = vector.broadcast %16 : vector<1x40xf32> to vector<16x40xf32>
    %18 = arith.addf %15, %17 : vector<16x40xf32>
    %cst_11 = arith.constant dense<0xFF800000> : vector<16xf32>
    %19 = vector.multi_reduction <maximumf>, %18, %cst_11 [1] : vector<16x40xf32> to vector<16xf32>
    %20 = vector.shape_cast %19 : vector<16xf32> to vector<16x1xf32>
    %21 = vector.broadcast %20 : vector<16x1xf32> to vector<16x40xf32>
    %22 = arith.subf %18, %21 : vector<16x40xf32>
    %23 = math.exp %22 : vector<16x40xf32>
    %cst_12 = arith.constant dense<0.000000e+00> : vector<16xf32>
    %24 = vector.multi_reduction <add>, %23, %cst_12 [1] : vector<16x40xf32> to vector<16xf32>
    %25 = vector.shape_cast %24 : vector<16xf32> to vector<16x1xf32>
    %26 = math.log %25 : vector<16x1xf32>
    %27 = vector.broadcast %26 : vector<16x1xf32> to vector<16x40xf32>
    %28 = arith.subf %22, %27 : vector<16x40xf32>
    %c0_13 = arith.constant 0 : index
    %c0_14 = arith.constant 0 : index
    %29 = vector.load %arg6[%c0_13, %c0_14] : memref<16x40xf32, #tpu.memory_space<vmem>>, vector<16x40xf32>
    tpu.vector_store %arg6[%c0_13, %c0_14], %28 {strides = array<i32>} : memref<16x40xf32, #tpu.memory_space<vmem>>, vector<16x40xf32>,
    return
  }
  func.func @transform_0(%arg0: i32) -> (i32, i32) {
    %c0_i32 = arith.constant 0 : i32
    %c0_i32_0 = arith.constant 0 : i32
    return %arg0, %c0_i32 : i32, i32
  }
  func.func @transform_1(%arg0: i32) -> (i32, i32) {
    %c0_i32 = arith.constant 0 : i32
    %c0_i32_0 = arith.constant 0 : i32
    %c0_i32_1 = arith.constant 0 : i32
    return %c0_i32, %c0_i32_0 : i32, i32
  }
  func.func @transform_2(%arg0: i32) -> (i32, i32) {
    %c0_i32 = arith.constant 0 : i32
    %c0_i32_0 = arith.constant 0 : i32
    %c0_i32_1 = arith.constant 0 : i32
    return %c0_i32, %c0_i32_0 : i32, i32
  }
  func.func @transform_3(%arg0: i32) -> (i32, i32) {
    %c0_i32 = arith.constant 0 : i32
    %c0_i32_0 = arith.constant 0 : i32
    %c0_i32_1 = arith.constant 0 : i32
    return %c0_i32, %c0_i32_0 : i32, i32
  }
  func.func @transform_4(%arg0: i32) -> (i32, i32) {
    %c0_i32 = arith.constant 0 : i32
    %c0_i32_0 = arith.constant 0 : i32
    %c0_i32_1 = arith.constant 0 : i32
    return %c0_i32, %c0_i32_0 : i32, i32
  }
  func.func @transform_5(%arg0: i32) -> (i32, i32) {
    %c0_i32 = arith.constant 0 : i32
    %c0_i32_0 = arith.constant 0 : i32
    return %arg0, %c0_i32 : i32, i32
  }
}

</mosaic_0001>

<llo_original>
// kernel: _ctc_decoder_impl.1
$region0: #{_ctc_decoder_impl.1}
  #allocation0 [shape = 'u32[]', space=smem, size = 0x4, offset = 0x4, fixed_abs, tag = 'smem constant byte address 0x4 - core index']
  #allocation1 [shape = 'u32[144,128]{1,0:T(1,128)}', space=vmem, size = 0x12000, scoped, tag = 'internal scratch']
  %s0 = inlined_call_operand.vmem [shape: f32[16,32], index: 0, kind: input, shape index: {}]
  %s1 = inlined_call_operand.vmem [shape: bf16[32,32], index: 1, kind: input, shape index: {}]
  %s2 = inlined_call_operand.vmem [shape: f32[1,32], index: 2, kind: input, shape index: {}]
  %s3 = inlined_call_operand.vmem [shape: bf16[32,40], index: 3, kind: input, shape index: {}]
  %s4 = inlined_call_operand.vmem [shape: f32[1,40], index: 4, kind: input, shape index: {}]
  %s5 = inlined_call_operand.hbm [shape: f32[16,40], index: 5, kind: output, shape index: {}]
  %s6 = sld [smem:[#allocation0]]
  $region30: #{_ctc_decoder_impl.1} parent=0
    _
  %s8 = ssub.s32 1, %s6
  %s9 = scalar_select 0, %s8, %s6
  $region1: #{_ctc_decoder_impl.1} parent=0
    #allocation2 [shape = 'u8[8192]{0}', space=vmem, size = 0x2000, scoped, tag = 'output window, operand 0, single buffered']
    #allocation3 [shape = 's32[1]{0}', space=sflag, size = 0x4, scoped, tag = 'scoped memory for _ctc_decoder_impl.1']
    %10 = vsyncpa [#allocation3], 0
    // Predicated region
    $region2: #{_ctc_decoder_impl.1} parent=1 // pred_check
      _
    $region3: #{_ctc_decoder_impl.1} parent=1 // pred_check_branch
      %12 = sbr.rel (0) target = $region5
    $region4: #{_ctc_decoder_impl.1} parent=1 // pred_region
      _
    $region5: #{_ctc_decoder_impl.1} parent=1 // pred_fallthru
      _
    // Predicated region
    $region6: #{_ctc_decoder_impl.1} parent=1 // pred_check
      _
    $region7: #{_ctc_decoder_impl.1} parent=1 // pred_check_branch
      %14 = sbr.rel (0) target = $region9
    $region8: #{_ctc_decoder_impl.1} parent=1 // pred_region
      _
    $region9: #{_ctc_decoder_impl.1} parent=1 // pred_fallthru
      _
    // Predicated region
    $region10: #{_ctc_decoder_impl.1} parent=1 // pred_check
      _
    $region11: #{_ctc_decoder_impl.1} parent=1 // pred_check_branch
      %16 = sbr.rel (0) target = $region13
    $region12: #{_ctc_decoder_impl.1} parent=1 // pred_region
      _
    $region13: #{_ctc_decoder_impl.1} parent=1 // pred_fallthru
      _
    // Predicated region
    $region14: #{_ctc_decoder_impl.1} parent=1 // pred_check
      _
    $region15: #{_ctc_decoder_impl.1} parent=1 // pred_check_branch
      %18 = sbr.rel (0) target = $region17
    $region16: #{_ctc_decoder_impl.1} parent=1 // pred_region
      _
    $region17: #{_ctc_decoder_impl.1} parent=1 // pred_fallthru
      _
    // Predicated region
    $region18: #{_ctc_decoder_impl.1} parent=1 // pred_check
      _
    $region19: #{_ctc_decoder_impl.1} parent=1 // pred_check_branch
      %20 = sbr.rel (0) target = $region21
    $region20: #{_ctc_decoder_impl.1} parent=1 // pred_region
      _
    $region21: #{_ctc_decoder_impl.1} parent=1 // pred_fallthru
      _
    %v22 = vld [vmem:[%s0] sm:$0xff]
    %v23 = vld [vmem:[%s0 + $0x8] sm:$0xff]
    %v24 = vpack.c.bf16 %v23, %v22
    %v25 = vld [vmem:[%s1] sm:$0xf]
    %v26 = vld [vmem:[%s1 + $0x4] sm:$0xf]
    %v27 = vld [vmem:[%s1 + $0x8] sm:$0xf]
    %v28 = vld [vmem:[%s1 + $0xc] sm:$0xf]
    %v29 = vld [vmem:[%s2] sm:$0x1]
    %v31 = vlaneseq
    %v32 = vshrl.u32 %v31, 7
    %v33 = vsub.s32 0, %v32
    %v34 = vrot.slane %v29, %v33
    %v40 = vunpack.c.l.b16 %v25
    %v41 = vunpack.c.l.b16 %v26
    %v42 = vunpack.c.l.b16 %v27
    %v43 = vunpack.c.l.b16 %v28
    %v44 = vpack.c.b16 %v41, %v40
    %v45 = vpack.c.b16 %v43, %v42
    %vm48 = vcmask 261120
    %v50 = vsel %vm48, %v24, 0
    %52 = vmatprep.subr.bf16.mxu0 0
    %53 = vmatpush1.bf16.msra.mxu0 %v44
    %54 = vmatprep.subr.bf16.mxu0 0
    %55 = vmatpush1.bf16.msra.mxu0 %v45
    %56 = vmatprep.subr.bf16.mxu0 0
    %57 = vmatpush1.bf16.msra.mxu0 0
    %58 = vmatprep.subr.bf16.mxu0 0
    %59 = vmatpush1.bf16.msra.mxu0 0
    %60 = vmatprep.subr.bf16.mxu0 0
    %61 = vmatpush1.bf16.msra.mxu0 0
    %62 = vmatprep.subr.bf16.mxu0 0
    %63 = vmatpush1.bf16.msra.mxu0 0
    %64 = vmatprep.subr.bf16.mxu0 0
    %65 = vmatpush1.bf16.msra.mxu0 0
    %66 = vmatprep.subr.bf16.mxu0 0
    %67 = vmatpush1.bf16.msra.mxu0 0
    %68 = vmatprep.subr.bf16.mxu0 0
    %69 = vmatpush1.bf16.msra.mxu0 0
    %70 = vmatprep.subr.bf16.mxu0 0
    %71 = vmatpush1.bf16.msra.mxu0 0
    %72 = vmatprep.subr.bf16.mxu0 0
    %73 = vmatpush1.bf16.msra.mxu0 0
    %74 = vmatprep.subr.bf16.mxu0 0
    %75 = vmatpush1.bf16.msra.mxu0 0
    %76 = vmatprep.subr.bf16.mxu0 0
    %77 = vmatpush1.bf16.msra.mxu0 0
    %78 = vmatprep.subr.bf16.mxu0 0
    %79 = vmatpush1.bf16.msra.mxu0 0
    %80 = vmatprep.subr.bf16.mxu0 0
    %81 = vmatpush1.bf16.msra.mxu0 0
    %82 = vmatprep.subr.bf16.mxu0 0
    %83 = vmatpush1.bf16.msra.mxu0 0
    %84 = vmatprep.mubr.bf16.mxu0 0
    %85 = vmatmul.mubr.bf16.gmra.mrb[0].mxu0 %v50
    %v86 = vpop.f32.mrb[0].mxu0
    %v87 = vadd.f32 %v34, %v86
    %v88 = vpop.f32.mrb[0].mxu0
    %v89 = vpop.f32.mrb[0].mxu0
    %v90 = vadd.f32 %v34, %v89
    %v91 = vpop.f32.mrb[0].mxu0
    %92 = vdwg.mxu0
    %v93 = vxor.u32 %v87, 2147483648
    %v94 = vxor.u32 %v90, 2147483648
    %v95 = vmul.f32 %v93, 1.442695
    %v96 = vpow.pop %v95
    %v97 = vmul.f32 %v94, 1.442695
    %v98 = vpow.pop %v97
    %v99 = vadd.f32 %v96, 1.0
    %v100 = vadd.f32 %v98, 1.0
    %v101 = vrcp.pop %v99
    %v102 = vmul.f32 1.0, %v101
    %v103 = vrcp.pop %v100
    %v104 = vmul.f32 1.0, %v103
    %v105 = vmul.f32 %v87, %v102
    %v106 = vmul.f32 %v90, %v104
    %v107 = vpack.c.bf16 %v106, %v105
    %v108 = vld [vmem:[%s3] sm:$0xf]
    %v109 = vld [vmem:[%s3 + $0x4] sm:$0xf]
    %v110 = vld [vmem:[%s3 + $0x8] sm:$0xf]
    %v111 = vld [vmem:[%s3 + $0xc] sm:$0xf]
    %v112 = vld [vmem:[%s4] sm:$0x1]
    %v114 = vlaneseq
    %v115 = vshrl.u32 %v114, 7
    %v116 = vsub.s32 0, %v115
    %v117 = vrot.slane %v112, %v116
    %v123 = vunpack.c.l.b16 %v108
    %v124 = vunpack.c.l.b16 %v109
    %v125 = vunpack.c.l.b16 %v110
    %v126 = vunpack.c.l.b16 %v111
    %v127 = vpack.c.b16 %v124, %v123
    %v128 = vpack.c.b16 %v126, %v125
    %v132 = vsel %vm48, %v107, 0
    %134 = vmatprep.subr.bf16.mxu0 0
    %135 = vmatpush1.bf16.msra.mxu0 %v127
    %136 = vmatprep.subr.bf16.mxu0 0
    %137 = vmatpush1.bf16.msra.mxu0 %v128
    %138 = vmatprep.subr.bf16.mxu0 0
    %139 = vmatpush1.bf16.msra.mxu0 0
    %140 = vmatprep.subr.bf16.mxu0 0
    %141 = vmatpush1.bf16.msra.mxu0 0
    %142 = vmatprep.subr.bf16.mxu0 0
    %143 = vmatpush1.bf16.msra.mxu0 0
    %144 = vmatprep.subr.bf16.mxu0 0
    %145 = vmatpush1.bf16.msra.mxu0 0
    %146 = vmatprep.subr.bf16.mxu0 0
    %147 = vmatpush1.bf16.msra.mxu0 0
    %148 = vmatprep.subr.bf16.mxu0 0
    %149 = vmatpush1.bf16.msra.mxu0 0
    %150 = vmatprep.subr.bf16.mxu0 0
    %151 = vmatpush1.bf16.msra.mxu0 0
    %152 = vmatprep.subr.bf16.mxu0 0
    %153 = vmatpush1.bf16.msra.mxu0 0
    %154 = vmatprep.subr.bf16.mxu0 0
    %155 = vmatpush1.bf16.msra.mxu0 0
    %156 = vmatprep.subr.bf16.mxu0 0
    %157 = vmatpush1.bf16.msra.mxu0 0
    %158 = vmatprep.subr.bf16.mxu0 0
    %159 = vmatpush1.bf16.msra.mxu0 0
    %160 = vmatprep.subr.bf16.mxu0 0
    %161 = vmatpush1.bf16.msra.mxu0 0
    %162 = vmatprep.subr.bf16.mxu0 0
    %163 = vmatpush1.bf16.msra.mxu0 0
    %164 = vmatprep.subr.bf16.mxu0 0
    %165 = vmatpush1.bf16.msra.mxu0 0
    %166 = vmatprep.mubr.bf16.mxu0 0
    %167 = vmatmul.mubr.bf16.gmra.mrb[0].mxu0 %v132
    %v168 = vpop.f32.mrb[0].mxu0
    %v169 = vadd.f32 %v117, %v168
    %v170 = vpop.f32.mrb[0].mxu0
    %v171 = vpop.f32.mrb[0].mxu0
    %v172 = vadd.f32 %v117, %v171
    %v173 = vpop.f32.mrb[0].mxu0
    %174 = vdwg.mxu0
    %vm175 = vcmask 326656
    %v176 = vsel %vm175, %v169, -inf
    %177 = vmax.xlane.f32.xlu0 %v176
    %v178 = vpop.xlane.xlu0 %177
    %v179 = vsel %vm175, %v172, -inf
    %180 = vmax.xlane.f32.xlu0 %v179
    %v181 = vpop.xlane.xlu0 %180
    %v182 = vsub.f32 %v169, %v178
    %v183 = vsub.f32 %v172, %v181
    %v184 = vmul.f32 %v182, 1.442695
    %v185 = vpow.pop %v184
    %v186 = vmul.f32 %v183, 1.442695
    %v187 = vpow.pop %v186
    %v188 = vsel %vm175, %v185, 0.0
    %189 = vadd.xlane.f32.xlu0 %v188
    %v190 = vpop.xlane.xlu0 %189
    %v191 = vsel %vm175, %v187, 0.0
    %192 = vadd.xlane.f32.xlu0 %v191
    %v193 = vpop.xlane.xlu0 %192
    %v194 = vlog2.pop %v190
    %v195 = vmul.f32 %v194, 0.6931472
    %v196 = vlog2.pop %v193
    %v197 = vmul.f32 %v196, 0.6931472
    %v198 = vsub.f32 %v182, %v195
    %v199 = vsub.f32 %v183, %v197
    %200 = vst.msk [vmem:[#allocation2] sm:$0xff] %vm175, %v198
    %201 = vst.msk [vmem:[#allocation2 + $0x8] sm:$0xff] %vm175, %v199
    // Predicated region
    $region22: #{_ctc_decoder_impl.1} parent=1 // pred_check
      _
    $region23: #{_ctc_decoder_impl.1} parent=1 // pred_check_branch
      %203 = sbr.rel (0) target = $region25
    $region24: #{_ctc_decoder_impl.1} parent=1 // pred_region
      %s205 = ssub.s32 256, 256
      %206 = vsyncadd [#allocation3], %s205
      %s207 = sshll.u32 [#allocation2], 4
      %s208 = int_to_ptr.vmem [resolvable:$true] %s207
      %213 = dma.vmem_to_hbm [thread:$0]  %s208, 256, %s5, [#allocation3], 128, 128, 8
    $region25: #{_ctc_decoder_impl.1} parent=1 // pred_fallthru
      _
    // Predicated region
    $region26: #{_ctc_decoder_impl.1} parent=1 // pred_check
      _
    $region27: #{_ctc_decoder_impl.1} parent=1 // pred_check_branch
      %215 = sbr.rel (0) target = $region29
    $region28: #{_ctc_decoder_impl.1} parent=1 // pred_region
      %216 = dma.done [#allocation3], 256
    $region29: #{_ctc_decoder_impl.1} parent=1 // pred_fallthru
      _
    %217 = vsyncpa [#allocation3], 1

</llo_original>
